<compile_context>
chip_gen: v7x
topology: tpu7x:2x2x1
jax: 0.10.0
libtpu: 0.0.40
codegen_flags: <defaults>
</compile_context>

<pallas_src>
import jax
import jax.numpy as jnp
from jax.experimental import pallas as pl
from jax.experimental.pallas import tpu as pltpu

LANE = 128


def _round_up(n, m):
    return ((n + m - 1) // m) * m


def mlp_kernel(x_ref, w1_ref, b1_ref, w2_ref, b2_ref, w3_ref, b3_ref, o_ref):
    # In-kernel cast: x is read from HBM as f32, narrowed on the VPU.
    x = x_ref[...].astype(jnp.bfloat16)
    # hidden 1: [TM, F] @ [F, 64] + [1, 64], ReLU   (bf16 operands, f32 accum)
    h1 = jnp.dot(x, w1_ref[...], preferred_element_type=jnp.float32)
    h1 = jnp.maximum(h1 + b1_ref[...], 0.0).astype(jnp.bfloat16)
    # hidden 2: [TM, 64] @ [64, 32] + [1, 32], ReLU
    h2 = jnp.dot(h1, w2_ref[...], preferred_element_type=jnp.float32)
    h2 = jnp.maximum(h2 + b2_ref[...], 0.0).astype(jnp.bfloat16)
    # head: [TM, 32] @ [32, 128(padded C)] + [1, 128] -> lane-dense bf16 store
    y = jnp.dot(h2, w3_ref[...], preferred_element_type=jnp.float32) + b3_ref[...]
    o_ref[...] = y.astype(o_ref.dtype)


def pack_params(params):
    """One-time prep: transpose PyTorch (out,in) weights to (in,out), cast to
    bf16, and zero-pad the head to a lane-dense 128-wide output."""
    num_classes = params["w3"].shape[0]
    c_pad = _round_up(max(num_classes, LANE), LANE)

    w1 = params["w1"].T.astype(jnp.bfloat16)                       # [F, 64]
    w2 = params["w2"].T.astype(jnp.bfloat16)                       # [64, 32]
    w3 = jnp.zeros((32, c_pad), jnp.bfloat16)
    w3 = w3.at[:, :num_classes].set(params["w3"].T.astype(jnp.bfloat16))

    b1 = params["b1"].reshape(1, -1).astype(jnp.float32)           # [1, 64]
    b2 = params["b2"].reshape(1, -1).astype(jnp.float32)           # [1, 32]
    b3 = jnp.zeros((1, c_pad), jnp.float32)
    b3 = b3.at[:, :num_classes].set(params["b3"].reshape(1, -1).astype(jnp.float32))

    return {
        "w1": w1, "b1": b1,
        "w2": w2, "b2": b2,
        "w3": w3, "b3": b3,
        "num_classes": num_classes,
    }


def mlp_forward(x, pp, tile_m=8192, trim_classes=True):
    """x: [B, input_size] float32. pp: output of pack_params.

    Returns [B, num_classes] bfloat16 logits (or the lane-padded [B, 128]
    slab when trim_classes=False, which avoids one extra HBM pass)."""
    B, F = x.shape
    C = pp["num_classes"]
    c_pad = pp["w3"].shape[1]

    # Batch tile: multiple of 16 (bf16 sublane packing), capped at tile_m, and
    # small enough that large B still yields >= ~4 grid steps (v7x megacore).
    tm = max(16, min(tile_m, _round_up(pl.cdiv(B, 4), 16)))
    grid = (pl.cdiv(B, tm),)  # ragged last tile; OOB reads unused, writes dropped

    # Weights/biases: full-array blocks, constant index_map -> VMEM-resident
    # across all batch tiles (no re-DMA per grid step).
    resident = lambda shape: pl.BlockSpec(shape, lambda i: (0, 0))

    cost = pl.CostEstimate(
        flops=2 * B * (F * 64 + 64 * 32 + 32 * c_pad),
        transcendentals=0,
        bytes_accessed=B * (4 * F + 2 * c_pad)
        + 2 * (F * 64 + 64 * 32 + 32 * c_pad)
        + 4 * (64 + 32 + c_pad),
    )

    out = pl.pallas_call(
        mlp_kernel,
        out_shape=jax.ShapeDtypeStruct((B, c_pad), jnp.bfloat16),
        grid_spec=pltpu.PrefetchScalarGridSpec(
            num_scalar_prefetch=0,
            grid=grid,
            in_specs=[
                pl.BlockSpec((tm, F), lambda i: (i, 0)),          # x: batch-tiled
                resident(pp["w1"].shape), resident(pp["b1"].shape),
                resident(pp["w2"].shape), resident(pp["b2"].shape),
                resident(pp["w3"].shape), resident(pp["b3"].shape),
            ],
            out_specs=pl.BlockSpec((tm, c_pad), lambda i: (i, 0)),
        ),
        compiler_params=pltpu.CompilerParams(
            # Batch tiles are independent -> shard across v7x's 2 TensorCores.
            dimension_semantics=("parallel",),
        ),
        cost_estimate=cost,
    )(x, pp["w1"], pp["b1"], pp["w2"], pp["b2"], pp["w3"], pp["b3"])

    if trim_classes:
        return out[:, :C]
    return out


def init_params(key, input_size, num_classes):
    """Deterministic init mirroring PyTorch Linear shapes (out, in)."""
    ks = jax.random.split(key, 6)

    def uniform(k, shape, fan_in):
        bound = 1.0 / jnp.sqrt(fan_in)
        return jax.random.uniform(k, shape, jnp.float32, -bound, bound)

    return {
        "w1": uniform(ks[0], (64, input_size), input_size),
        "b1": uniform(ks[1], (64,), input_size),
        "w2": uniform(ks[2], (32, 64), 64),
        "b2": uniform(ks[3], (32,), 64),
        "w3": uniform(ks[4], (num_classes, 32), 32),
        "b3": uniform(ks[5], (num_classes,), 32),
    }


def mlp_reference(x, p):
    """f32 reference of the PyTorch forward."""
    h1 = jnp.maximum(x @ p["w1"].T + p["b1"], 0.0)
    h2 = jnp.maximum(h1 @ p["w2"].T + p["b2"], 0.0)
    return h2 @ p["w3"].T + p["b3"]


if __name__ == "__main__":
    key = jax.random.PRNGKey(0)
    k_x, k_p = jax.random.split(key)

    batch = 8
    input_size = 16
    num_classes = 10  # head='linear'
    # TODO(synk): 'fourier' / 'gmm' heads from the original module are not implemented.

    x = jax.random.normal(k_x, (batch, input_size), jnp.float32)
    params = init_params(k_p, input_size, num_classes)
    packed = pack_params(params)

    out = mlp_forward(x, packed)
    out = jax.block_until_ready(out)

    ref = mlp_reference(x, params)
    assert out.shape == (batch, num_classes)
    # bf16 weights/activations/logits (f32 accumulation) -> compare against the
    # f32 reference with a tolerance matching bf16's ~0.4% relative precision.
    assert jnp.allclose(out.astype(jnp.float32), ref, atol=5e-2, rtol=5e-2), (
        float(jnp.max(jnp.abs(out.astype(jnp.float32) - ref)))
    )

    print("KERNEL_OK")
</pallas_src>

<mosaic_0001>
module attributes {stable_mosaic.version = 11 : i64} {
  func.func @mlp_kernel(%arg0: i32, %arg1: memref<16x16xf32, #tpu.memory_space<vmem>>, %arg2: memref<16x64xbf16, #tpu.memory_space<vmem>>, %arg3: memref<1x64xf32, #tpu.memory_space<vmem>>, %arg4: memref<64x32xbf16, #tpu.memory_space<vmem>>, %arg5: memref<1x32xf32, #tpu.memory_space<vmem>>, %arg6: memref<32x128xbf16, #tpu.memory_space<vmem>>, %arg7: memref<1x128xf32, #tpu.memory_space<vmem>>, %arg8: memref<16x128xbf16, #tpu.memory_space<vmem>>) attributes {dimension_semantics = [#tpu.dimension_semantics<parallel>], iteration_bounds = array<i64: 1>, scalar_prefetch = 0 : i64, scratch_operands = 0 : i64, tpu.core_type = #tpu.core_type<tc>, window_params = [{transform_indices = @transform_0, window_bounds = array<i64: 16, 16>}, {pipeline_mode = #tpu.pipeline_mode<synchronous>, transform_indices = @transform_1, window_bounds = array<i64: 16, 64>}, {pipeline_mode = #tpu.pipeline_mode<synchronous>, transform_indices = @transform_2, window_bounds = array<i64: 1, 64>}, {pipeline_mode = #tpu.pipeline_mode<synchronous>, transform_indices = @transform_3, window_bounds = array<i64: 64, 32>}, {pipeline_mode = #tpu.pipeline_mode<synchronous>, transform_indices = @transform_4, window_bounds = array<i64: 1, 32>}, {pipeline_mode = #tpu.pipeline_mode<synchronous>, transform_indices = @transform_5, window_bounds = array<i64: 32, 128>}, {pipeline_mode = #tpu.pipeline_mode<synchronous>, transform_indices = @transform_6, window_bounds = array<i64: 1, 128>}, {transform_indices = @transform_7, window_bounds = array<i64: 16, 128>}]} {
    %c0 = arith.constant 0 : index
    %c0_0 = arith.constant 0 : index
    %0 = vector.load %arg1[%c0, %c0_0] : memref<16x16xf32, #tpu.memory_space<vmem>>, vector<16x16xf32>
    %1 = arith.truncf %0 : vector<16x16xf32> to vector<16x16xbf16>
    %c0_1 = arith.constant 0 : index
    %c0_2 = arith.constant 0 : index
    %2 = vector.load %arg2[%c0_1, %c0_2] : memref<16x64xbf16, #tpu.memory_space<vmem>>, vector<16x64xbf16>
    %cst = arith.constant dense<0.000000e+00> : vector<16x64xf32>
    %3 = tpu.matmul %1, %2, %cst {dimension_numbers = #tpu.dot_dimension_numbers<[1], [0], [0], [1], [0, 0, 1, 1], [], []>} : vector<16x16xbf16>, vector<16x64xbf16>, vector<16x64xf32> -> vector<16x64xf32>
    %c0_3 = arith.constant 0 : index
    %c0_4 = arith.constant 0 : index
    %4 = vector.load %arg3[%c0_3, %c0_4] : memref<1x64xf32, #tpu.memory_space<vmem>>, vector<1x64xf32>
    %5 = vector.broadcast %4 : vector<1x64xf32> to vector<16x64xf32>
    %6 = arith.addf %3, %5 : vector<16x64xf32>
    %cst_5 = arith.constant 0.000000e+00 : f32
    %7 = vector.broadcast %cst_5 : f32 to vector<16x64xf32>
    %8 = arith.maximumf %6, %7 : vector<16x64xf32>
    %9 = arith.truncf %8 : vector<16x64xf32> to vector<16x64xbf16>
    %c0_6 = arith.constant 0 : index
    %c0_7 = arith.constant 0 : index
    %10 = vector.load %arg4[%c0_6, %c0_7] : memref<64x32xbf16, #tpu.memory_space<vmem>>, vector<64x32xbf16>
    %cst_8 = arith.constant dense<0.000000e+00> : vector<16x32xf32>
    %11 = tpu.matmul %9, %10, %cst_8 {dimension_numbers = #tpu.dot_dimension_numbers<[1], [0], [0], [1], [0, 0, 1, 1], [], []>} : vector<16x64xbf16>, vector<64x32xbf16>, vector<16x32xf32> -> vector<16x32xf32>
    %c0_9 = arith.constant 0 : index
    %c0_10 = arith.constant 0 : index
    %12 = vector.load %arg5[%c0_9, %c0_10] : memref<1x32xf32, #tpu.memory_space<vmem>>, vector<1x32xf32>
    %13 = vector.broadcast %12 : vector<1x32xf32> to vector<16x32xf32>
    %14 = arith.addf %11, %13 : vector<16x32xf32>
    %cst_11 = arith.constant 0.000000e+00 : f32
    %15 = vector.broadcast %cst_11 : f32 to vector<16x32xf32>
    %16 = arith.maximumf %14, %15 : vector<16x32xf32>
    %17 = arith.truncf %16 : vector<16x32xf32> to vector<16x32xbf16>
    %c0_12 = arith.constant 0 : index
    %c0_13 = arith.constant 0 : index
    %18 = vector.load %arg6[%c0_12, %c0_13] : memref<32x128xbf16, #tpu.memory_space<vmem>>, vector<32x128xbf16>
    %cst_14 = arith.constant dense<0.000000e+00> : vector<16x128xf32>
    %19 = tpu.matmul %17, %18, %cst_14 {dimension_numbers = #tpu.dot_dimension_numbers<[1], [0], [0], [1], [0, 0, 1, 1], [], []>} : vector<16x32xbf16>, vector<32x128xbf16>, vector<16x128xf32> -> vector<16x128xf32>
    %c0_15 = arith.constant 0 : index
    %c0_16 = arith.constant 0 : index
    %20 = vector.load %arg7[%c0_15, %c0_16] : memref<1x128xf32, #tpu.memory_space<vmem>>, vector<1x128xf32>
    %21 = vector.broadcast %20 : vector<1x128xf32> to vector<16x128xf32>
    %22 = arith.addf %19, %21 : vector<16x128xf32>
    %23 = arith.truncf %22 : vector<16x128xf32> to vector<16x128xbf16>
    %c0_17 = arith.constant 0 : index
    %c0_18 = arith.constant 0 : index
    %24 = vector.load %arg8[%c0_17, %c0_18] : memref<16x128xbf16, #tpu.memory_space<vmem>>, vector<16x128xbf16>
    tpu.vector_store %arg8[%c0_17, %c0_18], %23 {strides = array<i32>} : memref<16x128xbf16, #tpu.memory_space<vmem>>, vector<16x128xbf16>,
    return
  }
  func.func @transform_0(%arg0: i32) -> (i32, i32) {
    %c0_i32 = arith.constant 0 : i32
    %c0_i32_0 = arith.constant 0 : i32
    return %arg0, %c0_i32 : i32, i32
  }
  func.func @transform_1(%arg0: i32) -> (i32, i32) {
    %c0_i32 = arith.constant 0 : i32
    %c0_i32_0 = arith.constant 0 : i32
    %c0_i32_1 = arith.constant 0 : i32
    return %c0_i32, %c0_i32_0 : i32, i32
  }
  func.func @transform_2(%arg0: i32) -> (i32, i32) {
    %c0_i32 = arith.constant 0 : i32
    %c0_i32_0 = arith.constant 0 : i32
    %c0_i32_1 = arith.constant 0 : i32
    return %c0_i32, %c0_i32_0 : i32, i32
  }
  func.func @transform_3(%arg0: i32) -> (i32, i32) {
    %c0_i32 = arith.constant 0 : i32
    %c0_i32_0 = arith.constant 0 : i32
    %c0_i32_1 = arith.constant 0 : i32
    return %c0_i32, %c0_i32_0 : i32, i32
  }
  func.func @transform_4(%arg0: i32) -> (i32, i32) {
    %c0_i32 = arith.constant 0 : i32
    %c0_i32_0 = arith.constant 0 : i32
    %c0_i32_1 = arith.constant 0 : i32
    return %c0_i32, %c0_i32_0 : i32, i32
  }
  func.func @transform_5(%arg0: i32) -> (i32, i32) {
    %c0_i32 = arith.constant 0 : i32
    %c0_i32_0 = arith.constant 0 : i32
    %c0_i32_1 = arith.constant 0 : i32
    return %c0_i32, %c0_i32_0 : i32, i32
  }
  func.func @transform_6(%arg0: i32) -> (i32, i32) {
    %c0_i32 = arith.constant 0 : i32
    %c0_i32_0 = arith.constant 0 : i32
    %c0_i32_1 = arith.constant 0 : i32
    return %c0_i32, %c0_i32_0 : i32, i32
  }
  func.func @transform_7(%arg0: i32) -> (i32, i32) {
    %c0_i32 = arith.constant 0 : i32
    %c0_i32_0 = arith.constant 0 : i32
    return %arg0, %c0_i32 : i32, i32
  }
}

</mosaic_0001>

<llo_original>
// kernel: tpu_custom_call.1
$region0: #{tpu_custom_call.1}
  #allocation0 [shape = 'u32[]', space=smem, size = 0x4, offset = 0x4, fixed_abs, tag = 'smem constant byte address 0x4 - core index']
  #allocation1 [shape = 'u32[144,128]{1,0:T(1,128)}', space=vmem, size = 0x12000, scoped, tag = 'internal scratch']
  %s0 = inlined_call_operand.vmem [shape: f32[8,16], index: 0, kind: input, shape index: {}]
  %s1 = inlined_call_operand.vmem [shape: bf16[16,64], index: 1, kind: input, shape index: {}]
  %s2 = inlined_call_operand.vmem [shape: f32[1,64], index: 2, kind: input, shape index: {}]
  %s3 = inlined_call_operand.vmem [shape: bf16[64,32], index: 3, kind: input, shape index: {}]
  %s4 = inlined_call_operand.vmem [shape: f32[1,32], index: 4, kind: input, shape index: {}]
  %s5 = inlined_call_operand.vmem [shape: bf16[32,128], index: 5, kind: input, shape index: {}]
  %s6 = inlined_call_operand.vmem [shape: f32[1,128], index: 6, kind: input, shape index: {}]
  %s7 = inlined_call_operand.hbm [shape: bf16[8,128], index: 7, kind: output, shape index: {}]
  %s8 = sld [smem:[#allocation0]]
  $region38: #{tpu_custom_call.1} parent=0
    _
  %s10 = ssub.s32 1, %s8
  %s11 = scalar_select 0, %s10, %s8
  $region1: #{tpu_custom_call.1} parent=0
    #allocation2 [shape = 'u8[4096]{0}', space=vmem, size = 0x1000, scoped, tag = 'output window, operand 0, single buffered']
    #allocation3 [shape = 's32[1]{0}', space=sflag, size = 0x4, scoped, tag = 'scoped memory for tpu_custom_call.1']
    %12 = vsyncpa [#allocation3], 0
    // Predicated region
    $region2: #{tpu_custom_call.1} parent=1 // pred_check
      _
    $region3: #{tpu_custom_call.1} parent=1 // pred_check_branch
      %14 = sbr.rel (0) target = $region5
    $region4: #{tpu_custom_call.1} parent=1 // pred_region
      _
    $region5: #{tpu_custom_call.1} parent=1 // pred_fallthru
      _
    // Predicated region
    $region6: #{tpu_custom_call.1} parent=1 // pred_check
      _
    $region7: #{tpu_custom_call.1} parent=1 // pred_check_branch
      %16 = sbr.rel (0) target = $region9
    $region8: #{tpu_custom_call.1} parent=1 // pred_region
      _
    $region9: #{tpu_custom_call.1} parent=1 // pred_fallthru
      _
    // Predicated region
    $region10: #{tpu_custom_call.1} parent=1 // pred_check
      _
    $region11: #{tpu_custom_call.1} parent=1 // pred_check_branch
      %18 = sbr.rel (0) target = $region13
    $region12: #{tpu_custom_call.1} parent=1 // pred_region
      _
    $region13: #{tpu_custom_call.1} parent=1 // pred_fallthru
      _
    // Predicated region
    $region14: #{tpu_custom_call.1} parent=1 // pred_check
      _
    $region15: #{tpu_custom_call.1} parent=1 // pred_check_branch
      %20 = sbr.rel (0) target = $region17
    $region16: #{tpu_custom_call.1} parent=1 // pred_region
      _
    $region17: #{tpu_custom_call.1} parent=1 // pred_fallthru
      _
    // Predicated region
    $region18: #{tpu_custom_call.1} parent=1 // pred_check
      _
    $region19: #{tpu_custom_call.1} parent=1 // pred_check_branch
      %22 = sbr.rel (0) target = $region21
    $region20: #{tpu_custom_call.1} parent=1 // pred_region
      _
    $region21: #{tpu_custom_call.1} parent=1 // pred_fallthru
      _
    // Predicated region
    $region22: #{tpu_custom_call.1} parent=1 // pred_check
      _
    $region23: #{tpu_custom_call.1} parent=1 // pred_check_branch
      %24 = sbr.rel (0) target = $region25
    $region24: #{tpu_custom_call.1} parent=1 // pred_region
      _
    $region25: #{tpu_custom_call.1} parent=1 // pred_fallthru
      _
    // Predicated region
    $region26: #{tpu_custom_call.1} parent=1 // pred_check
      _
    $region27: #{tpu_custom_call.1} parent=1 // pred_check_branch
      %26 = sbr.rel (0) target = $region29
    $region28: #{tpu_custom_call.1} parent=1 // pred_region
      _
    $region29: #{tpu_custom_call.1} parent=1 // pred_fallthru
      _
    %v28 = vld [vmem:[%s0] sm:$0xff]
    %v29 = vld [vmem:[%s0 + $0x8] sm:$0xff]
    %v30 = vpack.c.bf16 %v29, %v28
    %v31 = vld [vmem:[%s1] sm:$0xf]
    %v32 = vld [vmem:[%s1 + $0x4] sm:$0xf]
    %v33 = vld [vmem:[%s2] sm:$0x1]
    %v35 = vlaneseq
    %v36 = vshrl.u32 %v35, 7
    %v37 = vsub.s32 0, %v36
    %v38 = vrot.slane %v33, %v37
    %v42 = vunpack.c.l.b16 %v31
    %v43 = vunpack.c.l.b16 %v32
    %v44 = vpack.c.b16 %v43, %v42
    %vm46 = vcmask 130048
    %v48 = vsel %vm46, %v30, 0
    %50 = vmatprep.subr.bf16.mxu0 0
    %51 = vmatpush1.bf16.msra.mxu0 %v44
    %52 = vmatprep.subr.bf16.mxu0 0
    %53 = vmatpush1.bf16.msra.mxu0 0
    %54 = vmatprep.subr.bf16.mxu0 0
    %55 = vmatpush1.bf16.msra.mxu0 0
    %56 = vmatprep.subr.bf16.mxu0 0
    %57 = vmatpush1.bf16.msra.mxu0 0
    %58 = vmatprep.subr.bf16.mxu0 0
    %59 = vmatpush1.bf16.msra.mxu0 0
    %60 = vmatprep.subr.bf16.mxu0 0
    %61 = vmatpush1.bf16.msra.mxu0 0
    %62 = vmatprep.subr.bf16.mxu0 0
    %63 = vmatpush1.bf16.msra.mxu0 0
    %64 = vmatprep.subr.bf16.mxu0 0
    %65 = vmatpush1.bf16.msra.mxu0 0
    %66 = vmatprep.subr.bf16.mxu0 0
    %67 = vmatpush1.bf16.msra.mxu0 0
    %68 = vmatprep.subr.bf16.mxu0 0
    %69 = vmatpush1.bf16.msra.mxu0 0
    %70 = vmatprep.subr.bf16.mxu0 0
    %71 = vmatpush1.bf16.msra.mxu0 0
    %72 = vmatprep.subr.bf16.mxu0 0
    %73 = vmatpush1.bf16.msra.mxu0 0
    %74 = vmatprep.subr.bf16.mxu0 0
    %75 = vmatpush1.bf16.msra.mxu0 0
    %76 = vmatprep.subr.bf16.mxu0 0
    %77 = vmatpush1.bf16.msra.mxu0 0
    %78 = vmatprep.subr.bf16.mxu0 0
    %79 = vmatpush1.bf16.msra.mxu0 0
    %80 = vmatprep.subr.bf16.mxu0 0
    %81 = vmatpush1.bf16.msra.mxu0 0
    %82 = vmatprep.mubr.bf16.mxu0 0
    %83 = vmatmul.mubr.bf16.gmra.mrb[0].mxu0 %v48
    %v84 = vpop.f32.mrb[0].mxu0
    %v85 = vadd.f32 %v38, %v84
    %v86 = vpop.f32.mrb[0].mxu0
    %v87 = vpop.f32.mrb[0].mxu0
    %v88 = vadd.f32 %v38, %v87
    %v89 = vpop.f32.mrb[0].mxu0
    %90 = vdwg.mxu0
    %v91 = vmax.f32 %v85, 0.0
    %v92 = vmax.f32 %v88, 0.0
    %v93 = vpack.c.bf16 %v92, %v91
    %v94 = vld [vmem:[%s3] sm:$0xf]
    %v95 = vld [vmem:[%s3 + $0x4] sm:$0xf]
    %v96 = vld [vmem:[%s3 + $0x8] sm:$0xf]
    %v97 = vld [vmem:[%s3 + $0xc] sm:$0xf]
    %v98 = vld [vmem:[%s3 + $0x10] sm:$0xf]
    %v99 = vld [vmem:[%s3 + $0x14] sm:$0xf]
    %v100 = vld [vmem:[%s3 + $0x18] sm:$0xf]
    %v101 = vld [vmem:[%s3 + $0x1c] sm:$0xf]
    %v102 = vld [vmem:[%s4] sm:$0x1]
    %v104 = vlaneseq
    %v105 = vshrl.u32 %v104, 7
    %v106 = vsub.s32 0, %v105
    %v107 = vrot.slane %v102, %v106
    %v117 = vunpack.c.l.b16 %v94
    %v118 = vunpack.c.l.b16 %v95
    %v119 = vunpack.c.l.b16 %v96
    %v120 = vunpack.c.l.b16 %v97
    %v121 = vunpack.c.l.b16 %v98
    %v122 = vunpack.c.l.b16 %v99
    %v123 = vunpack.c.l.b16 %v100
    %v124 = vunpack.c.l.b16 %v101
    %v125 = vpack.c.b16 %v118, %v117
    %v126 = vpack.c.b16 %v120, %v119
    %v127 = vpack.c.b16 %v122, %v121
    %v128 = vpack.c.b16 %v124, %v123
    %vm133 = vcmask 523264
    %v135 = vsel %vm133, %v93, 0
    %137 = vmatprep.subr.bf16.mxu0 0
    %138 = vmatpush1.bf16.msra.mxu0 %v125
    %139 = vmatprep.subr.bf16.mxu0 0
    %140 = vmatpush1.bf16.msra.mxu0 %v126
    %141 = vmatprep.subr.bf16.mxu0 0
    %142 = vmatpush1.bf16.msra.mxu0 %v127
    %143 = vmatprep.subr.bf16.mxu0 0
    %144 = vmatpush1.bf16.msra.mxu0 %v128
    %145 = vmatprep.subr.bf16.mxu0 0
    %146 = vmatpush1.bf16.msra.mxu0 0
    %147 = vmatprep.subr.bf16.mxu0 0
    %148 = vmatpush1.bf16.msra.mxu0 0
    %149 = vmatprep.subr.bf16.mxu0 0
    %150 = vmatpush1.bf16.msra.mxu0 0
    %151 = vmatprep.subr.bf16.mxu0 0
    %152 = vmatpush1.bf16.msra.mxu0 0
    %153 = vmatprep.subr.bf16.mxu0 0
    %154 = vmatpush1.bf16.msra.mxu0 0
    %155 = vmatprep.subr.bf16.mxu0 0
    %156 = vmatpush1.bf16.msra.mxu0 0
    %157 = vmatprep.subr.bf16.mxu0 0
    %158 = vmatpush1.bf16.msra.mxu0 0
    %159 = vmatprep.subr.bf16.mxu0 0
    %160 = vmatpush1.bf16.msra.mxu0 0
    %161 = vmatprep.subr.bf16.mxu0 0
    %162 = vmatpush1.bf16.msra.mxu0 0
    %163 = vmatprep.subr.bf16.mxu0 0
    %164 = vmatpush1.bf16.msra.mxu0 0
    %165 = vmatprep.subr.bf16.mxu0 0
    %166 = vmatpush1.bf16.msra.mxu0 0
    %167 = vmatprep.subr.bf16.mxu0 0
    %168 = vmatpush1.bf16.msra.mxu0 0
    %169 = vmatprep.mubr.bf16.mxu0 0
    %170 = vmatmul.mubr.bf16.gmra.mrb[0].mxu0 %v135
    %v171 = vpop.f32.mrb[0].mxu0
    %v172 = vadd.f32 %v107, %v171
    %v173 = vpop.f32.mrb[0].mxu0
    %v174 = vpop.f32.mrb[0].mxu0
    %v175 = vadd.f32 %v107, %v174
    %v176 = vpop.f32.mrb[0].mxu0
    %177 = vdwg.mxu0
    %v178 = vmax.f32 %v172, 0.0
    %v179 = vmax.f32 %v175, 0.0
    %v180 = vpack.c.bf16 %v179, %v178
    %v181 = vld [vmem:[%s5] sm:$0xf]
    %v182 = vld [vmem:[%s5 + $0x4] sm:$0xf]
    %v183 = vld [vmem:[%s5 + $0x8] sm:$0xf]
    %v184 = vld [vmem:[%s5 + $0xc] sm:$0xf]
    %v185 = vld [vmem:[%s6] sm:$0x1]
    %v187 = vlaneseq
    %v188 = vshrl.u32 %v187, 7
    %v189 = vsub.s32 0, %v188
    %v190 = vrot.slane %v185, %v189
    %v196 = vunpack.c.l.b16 %v181
    %v197 = vunpack.c.l.b16 %v182
    %v198 = vunpack.c.l.b16 %v183
    %v199 = vunpack.c.l.b16 %v184
    %v200 = vpack.c.b16 %v197, %v196
    %v201 = vpack.c.b16 %v199, %v198
    %vm204 = vcmask 261120
    %v206 = vsel %vm204, %v180, 0
    %208 = vmatprep.subr.bf16.mxu0 0
    %209 = vmatpush1.bf16.msra.mxu0 %v200
    %210 = vmatprep.subr.bf16.mxu0 0
    %211 = vmatpush1.bf16.msra.mxu0 %v201
    %212 = vmatprep.subr.bf16.mxu0 0
    %213 = vmatpush1.bf16.msra.mxu0 0
    %214 = vmatprep.subr.bf16.mxu0 0
    %215 = vmatpush1.bf16.msra.mxu0 0
    %216 = vmatprep.subr.bf16.mxu0 0
    %217 = vmatpush1.bf16.msra.mxu0 0
    %218 = vmatprep.subr.bf16.mxu0 0
    %219 = vmatpush1.bf16.msra.mxu0 0
    %220 = vmatprep.subr.bf16.mxu0 0
    %221 = vmatpush1.bf16.msra.mxu0 0
    %222 = vmatprep.subr.bf16.mxu0 0
    %223 = vmatpush1.bf16.msra.mxu0 0
    %224 = vmatprep.subr.bf16.mxu0 0
    %225 = vmatpush1.bf16.msra.mxu0 0
    %226 = vmatprep.subr.bf16.mxu0 0
    %227 = vmatpush1.bf16.msra.mxu0 0
    %228 = vmatprep.subr.bf16.mxu0 0
    %229 = vmatpush1.bf16.msra.mxu0 0
    %230 = vmatprep.subr.bf16.mxu0 0
    %231 = vmatpush1.bf16.msra.mxu0 0
    %232 = vmatprep.subr.bf16.mxu0 0
    %233 = vmatpush1.bf16.msra.mxu0 0
    %234 = vmatprep.subr.bf16.mxu0 0
    %235 = vmatpush1.bf16.msra.mxu0 0
    %236 = vmatprep.subr.bf16.mxu0 0
    %237 = vmatpush1.bf16.msra.mxu0 0
    %238 = vmatprep.subr.bf16.mxu0 0
    %239 = vmatpush1.bf16.msra.mxu0 0
    %240 = vmatprep.mubr.bf16.mxu0 0
    %241 = vmatmul.mubr.bf16.gmra.mrb[0].mxu0 %v206
    %v242 = vpop.f32.mrb[0].mxu0
    %v243 = vadd.f32 %v190, %v242
    %v244 = vpop.f32.mrb[0].mxu0
    %v245 = vpop.f32.mrb[0].mxu0
    %v246 = vadd.f32 %v190, %v245
    %v247 = vpop.f32.mrb[0].mxu0
    %248 = vdwg.mxu0
    %v249 = vpack.c.bf16 %v246, %v243
    %v251 = vunpack.c.l.b16 %v249
    %v252 = vunpack.c.h.b16 %v249
    %v253 = vpack.c.b16 %v251, %v251
    %v254 = vpack.c.b16 %v252, %v252
    %257 = vst [vmem:[#allocation2] sm:$0xf] %v253
    %258 = vst [vmem:[#allocation2 + $0x4] sm:$0xf] %v254
    // Predicated region
    $region30: #{tpu_custom_call.1} parent=1 // pred_check
      _
    $region31: #{tpu_custom_call.1} parent=1 // pred_check_branch
      %260 = sbr.rel (0) target = $region33
    $region32: #{tpu_custom_call.1} parent=1 // pred_region
      %s262 = ssub.s32 128, 64
      %263 = vsyncadd [#allocation3], %s262
      %s264 = sshll.u32 [#allocation2], 4
      %s265 = int_to_ptr.vmem [resolvable:$true] %s264
      %270 = dma.vmem_to_hbm [thread:$0]  %s265, 64, %s7, [#allocation3], 64, 64, 4
    $region33: #{tpu_custom_call.1} parent=1 // pred_fallthru
      _
    // Predicated region
    $region34: #{tpu_custom_call.1} parent=1 // pred_check
      _
    $region35: #{tpu_custom_call.1} parent=1 // pred_check_branch
      %272 = sbr.rel (0) target = $region37
    $region36: #{tpu_custom_call.1} parent=1 // pred_region
      %273 = dma.done [#allocation3], 128
    $region37: #{tpu_custom_call.1} parent=1 // pred_fallthru
      _
    %274 = vsyncpa [#allocation3], 1

</llo_original>
